<compile_context>
chip_gen: v5e
topology: v5e:2x2
jax: 0.10.0
libtpu: 0.0.40
codegen_flags: <defaults>
</compile_context>

<pallas_src>
import jax
import jax.numpy as jnp
from jax.experimental import pallas as pl
from jax.experimental.pallas import tpu as pltpu


def network_kernel(x_ref, wenc_ref, benc_ref, w1_ref, b1_ref, w2_ref, b2_ref,
                   z_ref, hnorm_ref, hidx_ref):
    """One batch-row tile of the fused [x_i; x_j] operand:
    encode -> project -> L2-normalize -> argmax.  Weights are resident."""
    x = x_ref[...]

    # ae encoder (synthetic linear encoder): h = x @ W_enc + b_enc
    h = jnp.dot(x, wenc_ref[...],
                preferred_element_type=jnp.float32) + benc_ref[...]

    # instance_projector: Linear -> ReLU -> Linear
    a = jnp.dot(h, w1_ref[...],
                preferred_element_type=jnp.float32) + b1_ref[...]
    a = jnp.maximum(a, 0.0)
    z = jnp.dot(a, w2_ref[...],
                preferred_element_type=jnp.float32) + b2_ref[...]

    def l2norm(v):
        # torch normalize(v, dim=1) = v / max(||v||, 1e-12)
        #                           = v * rsqrt(max(sum(v*v), 1e-24))  (EUP)
        ss = jnp.sum(v * v, axis=1, keepdims=True)
        return v * jax.lax.rsqrt(jnp.maximum(ss, 1e-24))

    z_ref[...] = l2norm(z)
    hnorm_ref[...] = l2norm(h)

    # argmax(h, dim=1) with first-occurrence tie-breaking (matches torch).
    hmax = jnp.max(h, axis=1, keepdims=True)
    ids = jax.lax.broadcasted_iota(jnp.int32, h.shape, 1)
    masked = jnp.where(h == hmax, ids, jnp.int32(h.shape[1]))
    hidx_ref[...] = jnp.min(masked, axis=1, keepdims=True)


def _pick_batch_tile(rows, d_in, rep_dim, feature_dim,
                     vmem_budget_bytes=40 * 1024 * 1024):
    """Largest row tile (multiple of 8, <= 512) whose double-buffered
    input/output blocks plus resident weights fit the VMEM budget.
    Budget is conservative so the same choice is valid on v7x's 64 MiB VMEM
    as well as v5e/v6e's 128 MiB."""
    weight_bytes = 4 * (d_in * rep_dim + rep_dim
                        + rep_dim * rep_dim + rep_dim
                        + rep_dim * feature_dim + feature_dim)
    # double-buffered input row + double-buffered output rows (z, h_norm, idx)
    per_row_bytes = 4 * (2 * d_in + 2 * (feature_dim + rep_dim + 1))
    avail = max(vmem_budget_bytes - 2 * weight_bytes, 8 * per_row_bytes)
    tb = min(512, avail // per_row_bytes)
    tb = max(8, (tb // 8) * 8)
    rows8 = ((rows + 7) // 8) * 8
    return min(tb, rows8)


def network_forward(x_i, x_j, params):
    """x_i, x_j: (B, C, H, W) float32.
    Returns (z_i, z_j, normalize(h_i), argmax(h_i, dim=1))."""
    B = x_i.shape[0]
    d_in = x_i.shape[1] * x_i.shape[2] * x_i.shape[3]
    rep_dim = params["w_enc"].shape[1]
    feature_dim = params["w2"].shape[1]

    # Fuse the two views into a single (2B, d_in) operand: one compute pass,
    # twice the MXU M-occupancy, half the instruction count.
    x = jnp.concatenate(
        [x_i.reshape(B, d_in), x_j.reshape(B, d_in)], axis=0
    ).astype(jnp.float32)
    rows = 2 * B

    tb = _pick_batch_tile(rows, d_in, rep_dim, feature_dim)
    rows_pad = ((rows + tb - 1) // tb) * tb
    if rows_pad != rows:
        x = jnp.pad(x, ((0, rows_pad - rows), (0, 0)))

    # TODO(synk): for very large d_in (real images, e.g. 3*224*224) add a
    # K-reduction grid axis over d_in with an f32 accumulator scratch so that
    # w_enc and the input tile stay within v7x's 64 MiB VMEM.

    row_spec = lambda shape: pl.BlockSpec(shape, lambda i: (i, 0))
    const_spec = lambda shape: pl.BlockSpec(shape, lambda i: (0, 0))

    z, h_norm, h_idx = pl.pallas_call(
        network_kernel,
        out_shape=(
            jax.ShapeDtypeStruct((rows_pad, feature_dim), jnp.float32),  # z
            jax.ShapeDtypeStruct((rows_pad, rep_dim), jnp.float32),      # ||h||
            jax.ShapeDtypeStruct((rows_pad, 1), jnp.int32),              # argmax
        ),
        grid=(rows_pad // tb,),
        in_specs=[
            row_spec((tb, d_in)),
            const_spec(params["w_enc"].shape),
            const_spec(params["b_enc"].shape),
            const_spec(params["w1"].shape),
            const_spec(params["b1"].shape),
            const_spec(params["w2"].shape),
            const_spec(params["b2"].shape),
        ],
        out_specs=(
            row_spec((tb, feature_dim)),
            row_spec((tb, rep_dim)),
            row_spec((tb, 1)),
        ),
        compiler_params=pltpu.CompilerParams(
            dimension_semantics=("parallel",),
            vmem_limit_bytes=48 * 1024 * 1024,
        ),
    )(x, params["w_enc"], params["b_enc"],
      params["w1"], params["b1"], params["w2"], params["b2"])

    z_i = z[:B]
    z_j = z[B:rows]
    h_i_norm = h_norm[:B]
    h_index = h_idx[:B, 0]
    return z_i, z_j, h_i_norm, h_index


def init_params(key, d_in, rep_dim, feature_dim):
    """Deterministic PyTorch-Linear-style init (uniform(-1/sqrt(fan_in), ...)).
    Weights are stored (in, out) so the kernel does x @ W + b."""
    ks = jax.random.split(key, 6)

    def lin(kw, kb, fan_in, fan_out):
        bound = 1.0 / jnp.sqrt(fan_in)
        w = jax.random.uniform(kw, (fan_in, fan_out), jnp.float32, -bound, bound)
        b = jax.random.uniform(kb, (1, fan_out), jnp.float32, -bound, bound)
        return w, b

    w_enc, b_enc = lin(ks[0], ks[1], d_in, rep_dim)
    w1, b1 = lin(ks[2], ks[3], rep_dim, rep_dim)
    w2, b2 = lin(ks[4], ks[5], rep_dim, feature_dim)
    return {"w_enc": w_enc, "b_enc": b_enc,
            "w1": w1, "b1": b1, "w2": w2, "b2": b2}


def reference_forward(x_i, x_j, params):
    """Pure-JAX reference mirroring the PyTorch forward (for validation)."""
    B = x_i.shape[0]
    d_in = x_i.shape[1] * x_i.shape[2] * x_i.shape[3]

    def enc(x):
        return x.reshape(B, d_in) @ params["w_enc"] + params["b_enc"]

    def proj(h):
        a = jnp.maximum(h @ params["w1"] + params["b1"], 0.0)
        return a @ params["w2"] + params["b2"]

    def norm(v):
        n = jnp.sqrt(jnp.sum(v * v, axis=1, keepdims=True))
        return v / jnp.maximum(n, 1e-12)

    h_i = enc(x_i)
    h_j = enc(x_j)
    return (norm(proj(h_i)), norm(proj(h_j)), norm(h_i),
            jnp.argmax(h_i, axis=1))


if __name__ == "__main__":
    key = jax.random.PRNGKey(0)
    k_xi, k_xj, k_p = jax.random.split(key, 3)

    B, C, H, W = 8, 4, 16, 16
    rep_dim, feature_dim = 32, 16
    d_in = C * H * W

    x_i = jax.random.normal(k_xi, (B, C, H, W), jnp.float32)
    x_j = jax.random.normal(k_xj, (B, C, H, W), jnp.float32)
    params = init_params(k_p, d_in, rep_dim, feature_dim)

    z_i, z_j, h_i_norm, h_index = network_forward(x_i, x_j, params)
    jax.block_until_ready((z_i, z_j, h_i_norm, h_index))

    # shape checks
    assert z_i.shape == (B, feature_dim) and z_j.shape == (B, feature_dim)
    assert h_i_norm.shape == (B, rep_dim) and h_index.shape == (B,)

    # unit-norm checks
    assert jnp.allclose(jnp.sum(z_i * z_i, axis=1), 1.0, atol=1e-4)
    assert jnp.allclose(jnp.sum(z_j * z_j, axis=1), 1.0, atol=1e-4)
    assert jnp.allclose(jnp.sum(h_i_norm * h_i_norm, axis=1), 1.0, atol=1e-4)

    # numeric check against the pure-JAX reference
    rz_i, rz_j, rh_i, ridx = reference_forward(x_i, x_j, params)
    assert jnp.allclose(z_i, rz_i, atol=2e-3, rtol=2e-3)
    assert jnp.allclose(z_j, rz_j, atol=2e-3, rtol=2e-3)
    assert jnp.allclose(h_i_norm, rh_i, atol=2e-3, rtol=2e-3)
    assert bool(jnp.all(h_index == ridx))

    print("KERNEL_OK")
</pallas_src>

<mosaic_0001>
module attributes {stable_mosaic.version = 11 : i64} {
  func.func @network_kernel(%arg0: i32, %arg1: memref<16x1024xf32, #tpu.memory_space<vmem>>, %arg2: memref<1024x32xf32, #tpu.memory_space<vmem>>, %arg3: memref<1x32xf32, #tpu.memory_space<vmem>>, %arg4: memref<32x32xf32, #tpu.memory_space<vmem>>, %arg5: memref<1x32xf32, #tpu.memory_space<vmem>>, %arg6: memref<32x16xf32, #tpu.memory_space<vmem>>, %arg7: memref<1x16xf32, #tpu.memory_space<vmem>>, %arg8: memref<16x16xf32, #tpu.memory_space<vmem>>, %arg9: memref<16x32xf32, #tpu.memory_space<vmem>>, %arg10: memref<16x1xi32, #tpu.memory_space<vmem>>) attributes {dimension_semantics = [#tpu.dimension_semantics<parallel>], iteration_bounds = array<i64: 1>, scalar_prefetch = 0 : i64, scratch_operands = 0 : i64, tpu.core_type = #tpu.core_type<tc>, window_params = [{transform_indices = @transform_0, window_bounds = array<i64: 16, 1024>}, {pipeline_mode = #tpu.pipeline_mode<synchronous>, transform_indices = @transform_1, window_bounds = array<i64: 1024, 32>}, {pipeline_mode = #tpu.pipeline_mode<synchronous>, transform_indices = @transform_2, window_bounds = array<i64: 1, 32>}, {pipeline_mode = #tpu.pipeline_mode<synchronous>, transform_indices = @transform_3, window_bounds = array<i64: 32, 32>}, {pipeline_mode = #tpu.pipeline_mode<synchronous>, transform_indices = @transform_4, window_bounds = array<i64: 1, 32>}, {pipeline_mode = #tpu.pipeline_mode<synchronous>, transform_indices = @transform_5, window_bounds = array<i64: 32, 16>}, {pipeline_mode = #tpu.pipeline_mode<synchronous>, transform_indices = @transform_6, window_bounds = array<i64: 1, 16>}, {transform_indices = @transform_7, window_bounds = array<i64: 16, 16>}, {transform_indices = @transform_8, window_bounds = array<i64: 16, 32>}, {transform_indices = @transform_9, window_bounds = array<i64: 16, 1>}]} {
    %c0 = arith.constant 0 : index
    %c0_0 = arith.constant 0 : index
    %0 = vector.load %arg1[%c0, %c0_0] : memref<16x1024xf32, #tpu.memory_space<vmem>>, vector<16x1024xf32>
    %c0_1 = arith.constant 0 : index
    %c0_2 = arith.constant 0 : index
    %1 = vector.load %arg2[%c0_1, %c0_2] : memref<1024x32xf32, #tpu.memory_space<vmem>>, vector<1024x32xf32>
    %cst = arith.constant dense<0.000000e+00> : vector<16x32xf32>
    %2 = tpu.matmul %0, %1, %cst {dimension_numbers = #tpu.dot_dimension_numbers<[1], [0], [0], [1], [0, 0, 1, 1], [], []>} : vector<16x1024xf32>, vector<1024x32xf32>, vector<16x32xf32> -> vector<16x32xf32>
    %c0_3 = arith.constant 0 : index
    %c0_4 = arith.constant 0 : index
    %3 = vector.load %arg3[%c0_3, %c0_4] : memref<1x32xf32, #tpu.memory_space<vmem>>, vector<1x32xf32>
    %4 = vector.broadcast %3 : vector<1x32xf32> to vector<16x32xf32>
    %5 = arith.addf %2, %4 : vector<16x32xf32>
    %c0_5 = arith.constant 0 : index
    %c0_6 = arith.constant 0 : index
    %6 = vector.load %arg4[%c0_5, %c0_6] : memref<32x32xf32, #tpu.memory_space<vmem>>, vector<32x32xf32>
    %cst_7 = arith.constant dense<0.000000e+00> : vector<16x32xf32>
    %7 = tpu.matmul %5, %6, %cst_7 {dimension_numbers = #tpu.dot_dimension_numbers<[1], [0], [0], [1], [0, 0, 1, 1], [], []>} : vector<16x32xf32>, vector<32x32xf32>, vector<16x32xf32> -> vector<16x32xf32>
    %c0_8 = arith.constant 0 : index
    %c0_9 = arith.constant 0 : index
    %8 = vector.load %arg5[%c0_8, %c0_9] : memref<1x32xf32, #tpu.memory_space<vmem>>, vector<1x32xf32>
    %9 = vector.broadcast %8 : vector<1x32xf32> to vector<16x32xf32>
    %10 = arith.addf %7, %9 : vector<16x32xf32>
    %cst_10 = arith.constant 0.000000e+00 : f32
    %11 = vector.broadcast %cst_10 : f32 to vector<16x32xf32>
    %12 = arith.maximumf %10, %11 : vector<16x32xf32>
    %c0_11 = arith.constant 0 : index
    %c0_12 = arith.constant 0 : index
    %13 = vector.load %arg6[%c0_11, %c0_12] : memref<32x16xf32, #tpu.memory_space<vmem>>, vector<32x16xf32>
    %cst_13 = arith.constant dense<0.000000e+00> : vector<16x16xf32>
    %14 = tpu.matmul %12, %13, %cst_13 {dimension_numbers = #tpu.dot_dimension_numbers<[1], [0], [0], [1], [0, 0, 1, 1], [], []>} : vector<16x32xf32>, vector<32x16xf32>, vector<16x16xf32> -> vector<16x16xf32>
    %c0_14 = arith.constant 0 : index
    %c0_15 = arith.constant 0 : index
    %15 = vector.load %arg7[%c0_14, %c0_15] : memref<1x16xf32, #tpu.memory_space<vmem>>, vector<1x16xf32>
    %16 = vector.broadcast %15 : vector<1x16xf32> to vector<16x16xf32>
    %17 = arith.addf %14, %16 : vector<16x16xf32>
    %18 = arith.mulf %17, %17 : vector<16x16xf32>
    %cst_16 = arith.constant dense<0.000000e+00> : vector<16xf32>
    %19 = vector.multi_reduction <add>, %18, %cst_16 [1] : vector<16x16xf32> to vector<16xf32>
    %20 = vector.shape_cast %19 : vector<16xf32> to vector<16x1xf32>
    %cst_17 = arith.constant 1.000000e-24 : f32
    %21 = vector.broadcast %cst_17 : f32 to vector<16x1xf32>
    %22 = arith.maximumf %20, %21 : vector<16x1xf32>
    %23 = math.rsqrt %22 : vector<16x1xf32>
    %24 = vector.broadcast %23 : vector<16x1xf32> to vector<16x16xf32>
    %25 = arith.mulf %17, %24 : vector<16x16xf32>
    %c0_18 = arith.constant 0 : index
    %c0_19 = arith.constant 0 : index
    %26 = vector.load %arg8[%c0_18, %c0_19] : memref<16x16xf32, #tpu.memory_space<vmem>>, vector<16x16xf32>
    tpu.vector_store %arg8[%c0_18, %c0_19], %25 {strides = array<i32>} : memref<16x16xf32, #tpu.memory_space<vmem>>, vector<16x16xf32>,
    %27 = arith.mulf %5, %5 : vector<16x32xf32>
    %cst_20 = arith.constant dense<0.000000e+00> : vector<16xf32>
    %28 = vector.multi_reduction <add>, %27, %cst_20 [1] : vector<16x32xf32> to vector<16xf32>
    %29 = vector.shape_cast %28 : vector<16xf32> to vector<16x1xf32>
    %cst_21 = arith.constant 1.000000e-24 : f32
    %30 = vector.broadcast %cst_21 : f32 to vector<16x1xf32>
    %31 = arith.maximumf %29, %30 : vector<16x1xf32>
    %32 = math.rsqrt %31 : vector<16x1xf32>
    %33 = vector.broadcast %32 : vector<16x1xf32> to vector<16x32xf32>
    %34 = arith.mulf %5, %33 : vector<16x32xf32>
    %c0_22 = arith.constant 0 : index
    %c0_23 = arith.constant 0 : index
    %35 = vector.load %arg9[%c0_22, %c0_23] : memref<16x32xf32, #tpu.memory_space<vmem>>, vector<16x32xf32>
    tpu.vector_store %arg9[%c0_22, %c0_23], %34 {strides = array<i32>} : memref<16x32xf32, #tpu.memory_space<vmem>>, vector<16x32xf32>,
    %cst_24 = arith.constant dense<0xFF800000> : vector<16xf32>
    %36 = vector.multi_reduction <maximumf>, %5, %cst_24 [1] : vector<16x32xf32> to vector<16xf32>
    %37 = vector.shape_cast %36 : vector<16xf32> to vector<16x1xf32>
    %38 = tpu.iota {dimensions = array<i32: 1>} : vector<16x32xi32>
    %39 = vector.broadcast %37 : vector<16x1xf32> to vector<16x32xf32>
    %40 = arith.cmpf oeq, %5, %39 : vector<16x32xf32>
    %c32_i32 = arith.constant 32 : i32
    %41 = vector.broadcast %c32_i32 : i32 to vector<16x32xi32>
    %42 = arith.select %40, %38, %41 : vector<16x32xi1>, vector<16x32xi32>
    %cst_25 = arith.constant dense<2147483647> : vector<16xi32>
    %43 = vector.multi_reduction <minsi>, %42, %cst_25 [1] : vector<16x32xi32> to vector<16xi32>
    %44 = vector.shape_cast %43 : vector<16xi32> to vector<16x1xi32>
    %c0_26 = arith.constant 0 : index
    %c0_27 = arith.constant 0 : index
    %45 = vector.load %arg10[%c0_26, %c0_27] : memref<16x1xi32, #tpu.memory_space<vmem>>, vector<16x1xi32>
    tpu.vector_store %arg10[%c0_26, %c0_27], %44 {strides = array<i32>} : memref<16x1xi32, #tpu.memory_space<vmem>>, vector<16x1xi32>,
    return
  }
  func.func @transform_0(%arg0: i32) -> (i32, i32) {
    %c0_i32 = arith.constant 0 : i32
    %c0_i32_0 = arith.constant 0 : i32
    return %arg0, %c0_i32 : i32, i32
  }
  func.func @transform_1(%arg0: i32) -> (i32, i32) {
    %c0_i32 = arith.constant 0 : i32
    %c0_i32_0 = arith.constant 0 : i32
    %c0_i32_1 = arith.constant 0 : i32
    return %c0_i32, %c0_i32_0 : i32, i32
  }
  func.func @transform_2(%arg0: i32) -> (i32, i32) {
    %c0_i32 = arith.constant 0 : i32
    %c0_i32_0 = arith.constant 0 : i32
    %c0_i32_1 = arith.constant 0 : i32
    return %c0_i32, %c0_i32_0 : i32, i32
  }
  func.func @transform_3(%arg0: i32) -> (i32, i32) {
    %c0_i32 = arith.constant 0 : i32
    %c0_i32_0 = arith.constant 0 : i32
    %c0_i32_1 = arith.constant 0 : i32
    return %c0_i32, %c0_i32_0 : i32, i32
  }
  func.func @transform_4(%arg0: i32) -> (i32, i32) {
    %c0_i32 = arith.constant 0 : i32
    %c0_i32_0 = arith.constant 0 : i32
    %c0_i32_1 = arith.constant 0 : i32
    return %c0_i32, %c0_i32_0 : i32, i32
  }
  func.func @transform_5(%arg0: i32) -> (i32, i32) {
    %c0_i32 = arith.constant 0 : i32
    %c0_i32_0 = arith.constant 0 : i32
    %c0_i32_1 = arith.constant 0 : i32
    return %c0_i32, %c0_i32_0 : i32, i32
  }
  func.func @transform_6(%arg0: i32) -> (i32, i32) {
    %c0_i32 = arith.constant 0 : i32
    %c0_i32_0 = arith.constant 0 : i32
    %c0_i32_1 = arith.constant 0 : i32
    return %c0_i32, %c0_i32_0 : i32, i32
  }
  func.func @transform_7(%arg0: i32) -> (i32, i32) {
    %c0_i32 = arith.constant 0 : i32
    %c0_i32_0 = arith.constant 0 : i32
    return %arg0, %c0_i32 : i32, i32
  }
  func.func @transform_8(%arg0: i32) -> (i32, i32) {
    %c0_i32 = arith.constant 0 : i32
    %c0_i32_0 = arith.constant 0 : i32
    return %arg0, %c0_i32 : i32, i32
  }
  func.func @transform_9(%arg0: i32) -> (i32, i32) {
    %c0_i32 = arith.constant 0 : i32
    %c0_i32_0 = arith.constant 0 : i32
    return %arg0, %c0_i32 : i32, i32
  }
}

</mosaic_0001>

<llo_original>
// kernel: tpu_custom_call.1
$region0: #{tpu_custom_call.1}
  #allocation0 [shape = 'u32[]', space=smem, size = 0x4, offset = 0x4, fixed_abs, tag = 'smem constant byte address 0x4 - core index']
  #allocation1 [shape = 'u32[72,128]{1,0:T(1,128)}', space=vmem, size = 0x9000, scoped, tag = 'internal scratch']
  %s0 = inlined_call_operand.vmem [shape: f32[16,1024], index: 0, kind: input, shape index: {}]
  %s1 = inlined_call_operand.vmem [shape: f32[1024,32], index: 1, kind: input, shape index: {}]
  %s2 = inlined_call_operand.vmem [shape: f32[1,32], index: 2, kind: input, shape index: {}]
  %s3 = inlined_call_operand.vmem [shape: f32[32,32], index: 3, kind: input, shape index: {}]
  %s4 = inlined_call_operand.vmem [shape: f32[1,32], index: 4, kind: input, shape index: {}]
  %s5 = inlined_call_operand.vmem [shape: f32[32,16], index: 5, kind: input, shape index: {}]
  %s6 = inlined_call_operand.vmem [shape: f32[1,16], index: 6, kind: input, shape index: {}]
  %s7 = inlined_call_operand.hbm [shape: f32[16,16], index: 7, kind: output, shape index: {0}]
  %s8 = inlined_call_operand.hbm [shape: f32[16,32], index: 8, kind: output, shape index: {1}]
  %s9 = inlined_call_operand.vmem [shape: s32[16,1], index: 9, kind: output, shape index: {2}]
  %10 = xla_tuple %s7, %s8, %s9
  %s11 = sld [smem:[#allocation0]]
  $region54: #{tpu_custom_call.1} parent=0
    _
  %s13 = ssub.s32 1, %s11
  %s14 = scalar_select 0, %s13, %s11
  $region1: #{tpu_custom_call.1} parent=0
    #allocation2 [shape = 'u8[8192]{0}', space=vmem, size = 0x2000, scoped, tag = 'output window, operand 0, single buffered']
    #allocation3 [shape = 's32[1]{0}', space=sflag, size = 0x4, scoped, tag = 'scoped memory for tpu_custom_call.1']
    #allocation4 [shape = 'u8[8192]{0}', space=vmem, size = 0x2000, scoped, tag = 'output window, operand 1, single buffered']
    #allocation5 [shape = 's32[1]{0}', space=sflag, size = 0x4, scoped, tag = 'scoped memory for tpu_custom_call.1']
    %15 = vsyncpa [#allocation3], 0
    %16 = vsyncpa [#allocation5], 0
    // Predicated region
    $region2: #{tpu_custom_call.1} parent=1 // pred_check
      _
    $region3: #{tpu_custom_call.1} parent=1 // pred_check_branch
      %18 = sbr.rel (0) target = $region5
    $region4: #{tpu_custom_call.1} parent=1 // pred_region
      _
    $region5: #{tpu_custom_call.1} parent=1 // pred_fallthru
      _
    // Predicated region
    $region6: #{tpu_custom_call.1} parent=1 // pred_check
      _
    $region7: #{tpu_custom_call.1} parent=1 // pred_check_branch
      %20 = sbr.rel (0) target = $region9
    $region8: #{tpu_custom_call.1} parent=1 // pred_region
      _
    $region9: #{tpu_custom_call.1} parent=1 // pred_fallthru
      _
    // Predicated region
    $region10: #{tpu_custom_call.1} parent=1 // pred_check
      _
    $region11: #{tpu_custom_call.1} parent=1 // pred_check_branch
      %22 = sbr.rel (0) target = $region13
    $region12: #{tpu_custom_call.1} parent=1 // pred_region
      _
    $region13: #{tpu_custom_call.1} parent=1 // pred_fallthru
      _
    // Predicated region
    $region14: #{tpu_custom_call.1} parent=1 // pred_check
      _
    $region15: #{tpu_custom_call.1} parent=1 // pred_check_branch
      %24 = sbr.rel (0) target = $region17
    $region16: #{tpu_custom_call.1} parent=1 // pred_region
      _
    $region17: #{tpu_custom_call.1} parent=1 // pred_fallthru
      _
    // Predicated region
    $region18: #{tpu_custom_call.1} parent=1 // pred_check
      _
    $region19: #{tpu_custom_call.1} parent=1 // pred_check_branch
      %26 = sbr.rel (0) target = $region21
    $region20: #{tpu_custom_call.1} parent=1 // pred_region
      _
    $region21: #{tpu_custom_call.1} parent=1 // pred_fallthru
      _
    // Predicated region
    $region22: #{tpu_custom_call.1} parent=1 // pred_check
      _
    $region23: #{tpu_custom_call.1} parent=1 // pred_check_branch
      %28 = sbr.rel (0) target = $region25
    $region24: #{tpu_custom_call.1} parent=1 // pred_region
      _
    $region25: #{tpu_custom_call.1} parent=1 // pred_fallthru
      _
    // Predicated region
    $region26: #{tpu_custom_call.1} parent=1 // pred_check
      _
    $region27: #{tpu_custom_call.1} parent=1 // pred_check_branch
      %30 = sbr.rel (0) target = $region29
    $region28: #{tpu_custom_call.1} parent=1 // pred_region
      _
    $region29: #{tpu_custom_call.1} parent=1 // pred_fallthru
      _
    %v31 = vld [vmem:[%s0] sm:$0xff]
    %v32 = vld [vmem:[%s0 + $0x8] sm:$0xff]
    %v33 = vld [vmem:[%s0 + $0x10] sm:$0xff]
    %v34 = vld [vmem:[%s0 + $0x18] sm:$0xff]
    %v35 = vld [vmem:[%s0 + $0x20] sm:$0xff]
    %v36 = vld [vmem:[%s0 + $0x28] sm:$0xff]
    %v37 = vld [vmem:[%s0 + $0x30] sm:$0xff]
    %v38 = vld [vmem:[%s0 + $0x38] sm:$0xff]
    %v39 = vld [vmem:[%s0 + $0x40] sm:$0xff]
    %v40 = vld [vmem:[%s0 + $0x48] sm:$0xff]
    %v41 = vld [vmem:[%s0 + $0x50] sm:$0xff]
    %v42 = vld [vmem:[%s0 + $0x58] sm:$0xff]
    %v43 = vld [vmem:[%s0 + $0x60] sm:$0xff]
    %v44 = vld [vmem:[%s0 + $0x68] sm:$0xff]
    %v45 = vld [vmem:[%s0 + $0x70] sm:$0xff]
    %v46 = vld [vmem:[%s0 + $0x78] sm:$0xff]
    %v47 = vld [vmem:[%s1] sm:$0xff]
    %v48 = vld [vmem:[%s1 + $0x8] sm:$0xff]
    %v49 = vld [vmem:[%s1 + $0x10] sm:$0xff]
    %v50 = vld [vmem:[%s1 + $0x18] sm:$0xff]
    %v51 = vld [vmem:[%s1 + $0x20] sm:$0xff]
    %v52 = vld [vmem:[%s1 + $0x28] sm:$0xff]
    %v53 = vld [vmem:[%s1 + $0x30] sm:$0xff]
    %v54 = vld [vmem:[%s1 + $0x38] sm:$0xff]
    %v55 = vld [vmem:[%s1 + $0x40] sm:$0xff]
    %v56 = vld [vmem:[%s1 + $0x48] sm:$0xff]
    %v57 = vld [vmem:[%s1 + $0x50] sm:$0xff]
    %v58 = vld [vmem:[%s1 + $0x58] sm:$0xff]
    %v59 = vld [vmem:[%s1 + $0x60] sm:$0xff]
    %v60 = vld [vmem:[%s1 + $0x68] sm:$0xff]
    %v61 = vld [vmem:[%s1 + $0x70] sm:$0xff]
    %v62 = vld [vmem:[%s1 + $0x78] sm:$0xff]
    %v63 = vld [vmem:[%s1 + $0x80] sm:$0xff]
    %v64 = vld [vmem:[%s1 + $0x88] sm:$0xff]
    %v65 = vld [vmem:[%s1 + $0x90] sm:$0xff]
    %v66 = vld [vmem:[%s1 + $0x98] sm:$0xff]
    %v67 = vld [vmem:[%s1 + $0xa0] sm:$0xff]
    %v68 = vld [vmem:[%s1 + $0xa8] sm:$0xff]
    %v69 = vld [vmem:[%s1 + $0xb0] sm:$0xff]
    %v70 = vld [vmem:[%s1 + $0xb8] sm:$0xff]
    %v71 = vld [vmem:[%s1 + $0xc0] sm:$0xff]
    %v72 = vld [vmem:[%s1 + $0xc8] sm:$0xff]
    %v73 = vld [vmem:[%s1 + $0xd0] sm:$0xff]
    %v74 = vld [vmem:[%s1 + $0xd8] sm:$0xff]
    %v75 = vld [vmem:[%s1 + $0xe0] sm:$0xff]
    %v76 = vld [vmem:[%s1 + $0xe8] sm:$0xff]
    %v77 = vld [vmem:[%s1 + $0xf0] sm:$0xff]
    %v78 = vld [vmem:[%s1 + $0xf8] sm:$0xff]
    %v79 = vld [vmem:[%s1 + $0x100] sm:$0xff]
    %v80 = vld [vmem:[%s1 + $0x108] sm:$0xff]
    %v81 = vld [vmem:[%s1 + $0x110] sm:$0xff]
    %v82 = vld [vmem:[%s1 + $0x118] sm:$0xff]
    %v83 = vld [vmem:[%s1 + $0x120] sm:$0xff]
    %v84 = vld [vmem:[%s1 + $0x128] sm:$0xff]
    %v85 = vld [vmem:[%s1 + $0x130] sm:$0xff]
    %v86 = vld [vmem:[%s1 + $0x138] sm:$0xff]
    %v87 = vld [vmem:[%s1 + $0x140] sm:$0xff]
    %v88 = vld [vmem:[%s1 + $0x148] sm:$0xff]
    %v89 = vld [vmem:[%s1 + $0x150] sm:$0xff]
    %v90 = vld [vmem:[%s1 + $0x158] sm:$0xff]
    %v91 = vld [vmem:[%s1 + $0x160] sm:$0xff]
    %v92 = vld [vmem:[%s1 + $0x168] sm:$0xff]
    %v93 = vld [vmem:[%s1 + $0x170] sm:$0xff]
    %v94 = vld [vmem:[%s1 + $0x178] sm:$0xff]
    %v95 = vld [vmem:[%s1 + $0x180] sm:$0xff]
    %v96 = vld [vmem:[%s1 + $0x188] sm:$0xff]
    %v97 = vld [vmem:[%s1 + $0x190] sm:$0xff]
    %v98 = vld [vmem:[%s1 + $0x198] sm:$0xff]
    %v99 = vld [vmem:[%s1 + $0x1a0] sm:$0xff]
    %v100 = vld [vmem:[%s1 + $0x1a8] sm:$0xff]
    %v101 = vld [vmem:[%s1 + $0x1b0] sm:$0xff]
    %v102 = vld [vmem:[%s1 + $0x1b8] sm:$0xff]
    %v103 = vld [vmem:[%s1 + $0x1c0] sm:$0xff]
    %v104 = vld [vmem:[%s1 + $0x1c8] sm:$0xff]
    %v105 = vld [vmem:[%s1 + $0x1d0] sm:$0xff]
    %v106 = vld [vmem:[%s1 + $0x1d8] sm:$0xff]
    %v107 = vld [vmem:[%s1 + $0x1e0] sm:$0xff]
    %v108 = vld [vmem:[%s1 + $0x1e8] sm:$0xff]
    %v109 = vld [vmem:[%s1 + $0x1f0] sm:$0xff]
    %v110 = vld [vmem:[%s1 + $0x1f8] sm:$0xff]
    %v111 = vld [vmem:[%s1 + $0x200] sm:$0xff]
    %v112 = vld [vmem:[%s1 + $0x208] sm:$0xff]
    %v113 = vld [vmem:[%s1 + $0x210] sm:$0xff]
    %v114 = vld [vmem:[%s1 + $0x218] sm:$0xff]
    %v115 = vld [vmem:[%s1 + $0x220] sm:$0xff]
    %v116 = vld [vmem:[%s1 + $0x228] sm:$0xff]
    %v117 = vld [vmem:[%s1 + $0x230] sm:$0xff]
    %v118 = vld [vmem:[%s1 + $0x238] sm:$0xff]
    %v119 = vld [vmem:[%s1 + $0x240] sm:$0xff]
    %v120 = vld [vmem:[%s1 + $0x248] sm:$0xff]
    %v121 = vld [vmem:[%s1 + $0x250] sm:$0xff]
    %v122 = vld [vmem:[%s1 + $0x258] sm:$0xff]
    %v123 = vld [vmem:[%s1 + $0x260] sm:$0xff]
    %v124 = vld [vmem:[%s1 + $0x268] sm:$0xff]
    %v125 = vld [vmem:[%s1 + $0x270] sm:$0xff]
    %v126 = vld [vmem:[%s1 + $0x278] sm:$0xff]
    %v127 = vld [vmem:[%s1 + $0x280] sm:$0xff]
    %v128 = vld [vmem:[%s1 + $0x288] sm:$0xff]
    %v129 = vld [vmem:[%s1 + $0x290] sm:$0xff]
    %v130 = vld [vmem:[%s1 + $0x298] sm:$0xff]
    %v131 = vld [vmem:[%s1 + $0x2a0] sm:$0xff]
    %v132 = vld [vmem:[%s1 + $0x2a8] sm:$0xff]
    %v133 = vld [vmem:[%s1 + $0x2b0] sm:$0xff]
    %v134 = vld [vmem:[%s1 + $0x2b8] sm:$0xff]
    %v135 = vld [vmem:[%s1 + $0x2c0] sm:$0xff]
    %v136 = vld [vmem:[%s1 + $0x2c8] sm:$0xff]
    %v137 = vld [vmem:[%s1 + $0x2d0] sm:$0xff]
    %v138 = vld [vmem:[%s1 + $0x2d8] sm:$0xff]
    %v139 = vld [vmem:[%s1 + $0x2e0] sm:$0xff]
    %v140 = vld [vmem:[%s1 + $0x2e8] sm:$0xff]
    %v141 = vld [vmem:[%s1 + $0x2f0] sm:$0xff]
    %v142 = vld [vmem:[%s1 + $0x2f8] sm:$0xff]
    %v143 = vld [vmem:[%s1 + $0x300] sm:$0xff]
    %v144 = vld [vmem:[%s1 + $0x308] sm:$0xff]
    %v145 = vld [vmem:[%s1 + $0x310] sm:$0xff]
    %v146 = vld [vmem:[%s1 + $0x318] sm:$0xff]
    %v147 = vld [vmem:[%s1 + $0x320] sm:$0xff]
    %v148 = vld [vmem:[%s1 + $0x328] sm:$0xff]
    %v149 = vld [vmem:[%s1 + $0x330] sm:$0xff]
    %v150 = vld [vmem:[%s1 + $0x338] sm:$0xff]
    %v151 = vld [vmem:[%s1 + $0x340] sm:$0xff]
    %v152 = vld [vmem:[%s1 + $0x348] sm:$0xff]
    %v153 = vld [vmem:[%s1 + $0x350] sm:$0xff]
    %v154 = vld [vmem:[%s1 + $0x358] sm:$0xff]
    %v155 = vld [vmem:[%s1 + $0x360] sm:$0xff]
    %v156 = vld [vmem:[%s1 + $0x368] sm:$0xff]
    %v157 = vld [vmem:[%s1 + $0x370] sm:$0xff]
    %v158 = vld [vmem:[%s1 + $0x378] sm:$0xff]
    %v159 = vld [vmem:[%s1 + $0x380] sm:$0xff]
    %v160 = vld [vmem:[%s1 + $0x388] sm:$0xff]
    %v161 = vld [vmem:[%s1 + $0x390] sm:$0xff]
    %v162 = vld [vmem:[%s1 + $0x398] sm:$0xff]
    %v163 = vld [vmem:[%s1 + $0x3a0] sm:$0xff]
    %v164 = vld [vmem:[%s1 + $0x3a8] sm:$0xff]
    %v165 = vld [vmem:[%s1 + $0x3b0] sm:$0xff]
    %v166 = vld [vmem:[%s1 + $0x3b8] sm:$0xff]
    %v167 = vld [vmem:[%s1 + $0x3c0] sm:$0xff]
    %v168 = vld [vmem:[%s1 + $0x3c8] sm:$0xff]
    %v169 = vld [vmem:[%s1 + $0x3d0] sm:$0xff]
    %v170 = vld [vmem:[%s1 + $0x3d8] sm:$0xff]
    %v171 = vld [vmem:[%s1 + $0x3e0] sm:$0xff]
    %v172 = vld [vmem:[%s1 + $0x3e8] sm:$0xff]
    %v173 = vld [vmem:[%s1 + $0x3f0] sm:$0xff]
    %v174 = vld [vmem:[%s1 + $0x3f8] sm:$0xff]
    %v175 = vld [vmem:[%s2] sm:$0x1]
    %v177 = vperm.slane %v175, 0
    %179 = vmatpush.msra.mxu0 %v62
    %180 = vmatpush.msra.mxu0 %v61
    %181 = vmatpush.msra.mxu0 %v60
    %182 = vmatpush.msra.mxu0 %v59
    %183 = vmatpush.msra.mxu0 %v58
    %184 = vmatpush.msra.mxu0 %v57
    %185 = vmatpush.msra.mxu0 %v56
    %186 = vmatpush.msra.mxu0 %v55
    %187 = vmatpush.msra.mxu0 %v54
    %188 = vmatpush.msra.mxu0 %v53
    %189 = vmatpush.msra.mxu0 %v52
    %190 = vmatpush.msra.mxu0 %v51
    %191 = vmatpush.msra.mxu0 %v50
    %192 = vmatpush.msra.mxu0 %v49
    %193 = vmatpush.msra.mxu0 %v48
    %194 = vmatpush.msra.mxu0 %v47
    %195 = vmatmul.f32.gmra.mxu0 %v31
    %v196 = vpop.f32.mrf.mxu0
    %v197 = vadd.f32 %v177, %v196
    %198 = vmatmul.f32.gmra.mxu0 %v39
    %v199 = vpop.f32.mrf.mxu0
    %v200 = vadd.f32 %v177, %v199
    %201 = vdwg.mxu0
    %202 = vmatpush.msra.mxu0 %v78
    %203 = vmatpush.msra.mxu0 %v77
    %204 = vmatpush.msra.mxu0 %v76
    %205 = vmatpush.msra.mxu0 %v75
    %206 = vmatpush.msra.mxu0 %v74
    %207 = vmatpush.msra.mxu0 %v73
    %208 = vmatpush.msra.mxu0 %v72
    %209 = vmatpush.msra.mxu0 %v71
    %210 = vmatpush.msra.mxu0 %v70
    %211 = vmatpush.msra.mxu0 %v69
    %212 = vmatpush.msra.mxu0 %v68
    %213 = vmatpush.msra.mxu0 %v67
    %214 = vmatpush.msra.mxu0 %v66
    %215 = vmatpush.msra.mxu0 %v65
    %216 = vmatpush.msra.mxu0 %v64
    %217 = vmatpush.msra.mxu0 %v63
    %218 = vmatmul.f32.gmra.mxu0 %v32
    %v219 = vpop.f32.mrf.mxu0
    %v220 = vadd.f32 %v197, %v219
    %221 = vmatmul.f32.gmra.mxu0 %v40
    %v222 = vpop.f32.mrf.mxu0
    %v223 = vadd.f32 %v200, %v222
    %224 = vdwg.mxu0
    %225 = vmatpush.msra.mxu0 %v94
    %226 = vmatpush.msra.mxu0 %v93
    %227 = vmatpush.msra.mxu0 %v92
    %228 = vmatpush.msra.mxu0 %v91
    %229 = vmatpush.msra.mxu0 %v90
    %230 = vmatpush.msra.mxu0 %v89
    %231 = vmatpush.msra.mxu0 %v88
    %232 = vmatpush.msra.mxu0 %v87
    %233 = vmatpush.msra.mxu0 %v86
    %234 = vmatpush.msra.mxu0 %v85
    %235 = vmatpush.msra.mxu0 %v84
    %236 = vmatpush.msra.mxu0 %v83
    %237 = vmatpush.msra.mxu0 %v82
    %238 = vmatpush.msra.mxu0 %v81
    %239 = vmatpush.msra.mxu0 %v80
    %240 = vmatpush.msra.mxu0 %v79
    %241 = vmatmul.f32.gmra.mxu0 %v33
    %v242 = vpop.f32.mrf.mxu0
    %v243 = vadd.f32 %v220, %v242
    %244 = vmatmul.f32.gmra.mxu0 %v41
    %v245 = vpop.f32.mrf.mxu0
    %v246 = vadd.f32 %v223, %v245
    %247 = vdwg.mxu0
    %248 = vmatpush.msra.mxu0 %v110
    %249 = vmatpush.msra.mxu0 %v109
    %250 = vmatpush.msra.mxu0 %v108
    %251 = vmatpush.msra.mxu0 %v107
    %252 = vmatpush.msra.mxu0 %v106
    %253 = vmatpush.msra.mxu0 %v105
    %254 = vmatpush.msra.mxu0 %v104
    %255 = vmatpush.msra.mxu0 %v103
    %256 = vmatpush.msra.mxu0 %v102
    %257 = vmatpush.msra.mxu0 %v101
    %258 = vmatpush.msra.mxu0 %v100
    %259 = vmatpush.msra.mxu0 %v99
    %260 = vmatpush.msra.mxu0 %v98
    %261 = vmatpush.msra.mxu0 %v97
    %262 = vmatpush.msra.mxu0 %v96
    %263 = vmatpush.msra.mxu0 %v95
    %264 = vmatmul.f32.gmra.mxu0 %v34
    %v265 = vpop.f32.mrf.mxu0
    %v266 = vadd.f32 %v243, %v265
    %267 = vmatmul.f32.gmra.mxu0 %v42
    %v268 = vpop.f32.mrf.mxu0
    %v269 = vadd.f32 %v246, %v268
    %270 = vdwg.mxu0
    %271 = vmatpush.msra.mxu0 %v126
    %272 = vmatpush.msra.mxu0 %v125
    %273 = vmatpush.msra.mxu0 %v124
    %274 = vmatpush.msra.mxu0 %v123
    %275 = vmatpush.msra.mxu0 %v122
    %276 = vmatpush.msra.mxu0 %v121
    %277 = vmatpush.msra.mxu0 %v120
    %278 = vmatpush.msra.mxu0 %v119
    %279 = vmatpush.msra.mxu0 %v118
    %280 = vmatpush.msra.mxu0 %v117
    %281 = vmatpush.msra.mxu0 %v116
    %282 = vmatpush.msra.mxu0 %v115
    %283 = vmatpush.msra.mxu0 %v114
    %284 = vmatpush.msra.mxu0 %v113
    %285 = vmatpush.msra.mxu0 %v112
    %286 = vmatpush.msra.mxu0 %v111
    %287 = vmatmul.f32.gmra.mxu0 %v35
    %v288 = vpop.f32.mrf.mxu0
    %v289 = vadd.f32 %v266, %v288
    %290 = vmatmul.f32.gmra.mxu0 %v43
    %v291 = vpop.f32.mrf.mxu0
    %v292 = vadd.f32 %v269, %v291
    %293 = vdwg.mxu0
    %294 = vmatpush.msra.mxu0 %v142
    %295 = vmatpush.msra.mxu0 %v141
    %296 = vmatpush.msra.mxu0 %v140
    %297 = vmatpush.msra.mxu0 %v139
    %298 = vmatpush.msra.mxu0 %v138
    %299 = vmatpush.msra.mxu0 %v137
    %300 = vmatpush.msra.mxu0 %v136
    %301 = vmatpush.msra.mxu0 %v135
    %302 = vmatpush.msra.mxu0 %v134
    %303 = vmatpush.msra.mxu0 %v133
    %304 = vmatpush.msra.mxu0 %v132
    %305 = vmatpush.msra.mxu0 %v131
    %306 = vmatpush.msra.mxu0 %v130
    %307 = vmatpush.msra.mxu0 %v129
    %308 = vmatpush.msra.mxu0 %v128
    %309 = vmatpush.msra.mxu0 %v127
    %310 = vmatmul.f32.gmra.mxu0 %v36
    %v311 = vpop.f32.mrf.mxu0
    %v312 = vadd.f32 %v289, %v311
    %313 = vmatmul.f32.gmra.mxu0 %v44
    %v314 = vpop.f32.mrf.mxu0
    %v315 = vadd.f32 %v292, %v314
    %316 = vdwg.mxu0
    %317 = vmatpush.msra.mxu0 %v158
    %318 = vmatpush.msra.mxu0 %v157
    %319 = vmatpush.msra.mxu0 %v156
    %320 = vmatpush.msra.mxu0 %v155
    %321 = vmatpush.msra.mxu0 %v154
    %322 = vmatpush.msra.mxu0 %v153
    %323 = vmatpush.msra.mxu0 %v152
    %324 = vmatpush.msra.mxu0 %v151
    %325 = vmatpush.msra.mxu0 %v150
    %326 = vmatpush.msra.mxu0 %v149
    %327 = vmatpush.msra.mxu0 %v148
    %328 = vmatpush.msra.mxu0 %v147
    %329 = vmatpush.msra.mxu0 %v146
    %330 = vmatpush.msra.mxu0 %v145
    %331 = vmatpush.msra.mxu0 %v144
    %332 = vmatpush.msra.mxu0 %v143
    %333 = vmatmul.f32.gmra.mxu0 %v37
    %v334 = vpop.f32.mrf.mxu0
    %v335 = vadd.f32 %v312, %v334
    %336 = vmatmul.f32.gmra.mxu0 %v45
    %v337 = vpop.f32.mrf.mxu0
    %v338 = vadd.f32 %v315, %v337
    %339 = vdwg.mxu0
    %340 = vmatpush.msra.mxu0 %v174
    %341 = vmatpush.msra.mxu0 %v173
    %342 = vmatpush.msra.mxu0 %v172
    %343 = vmatpush.msra.mxu0 %v171
    %344 = vmatpush.msra.mxu0 %v170
    %345 = vmatpush.msra.mxu0 %v169
    %346 = vmatpush.msra.mxu0 %v168
    %347 = vmatpush.msra.mxu0 %v167
    %348 = vmatpush.msra.mxu0 %v166
    %349 = vmatpush.msra.mxu0 %v165
    %350 = vmatpush.msra.mxu0 %v164
    %351 = vmatpush.msra.mxu0 %v163
    %352 = vmatpush.msra.mxu0 %v162
    %353 = vmatpush.msra.mxu0 %v161
    %354 = vmatpush.msra.mxu0 %v160
    %355 = vmatpush.msra.mxu0 %v159
    %356 = vmatmul.f32.gmra.mxu0 %v38
    %v357 = vpop.f32.mrf.mxu0
    %v358 = vadd.f32 %v335, %v357
    %359 = vmatmul.f32.gmra.mxu0 %v46
    %v360 = vpop.f32.mrf.mxu0
    %v361 = vadd.f32 %v338, %v360
    %362 = vdwg.mxu0
    %v363 = vld [vmem:[%s3] sm:$0xff]
    %v364 = vld [vmem:[%s3 + $0x8] sm:$0xff]
    %v365 = vld [vmem:[%s3 + $0x10] sm:$0xff]
    %v366 = vld [vmem:[%s3 + $0x18] sm:$0xff]
    %v367 = vld [vmem:[%s4] sm:$0x1]
    %v369 = vperm.slane %v367, 0
    %vm371 = vcmask 261120
    %v373 = vsel %vm371, %v358, 0
    %v376 = vsel %vm371, %v361, 0
    %378 = vmatpush.msra.mxu0 0.0
    %379 = vmatpush.msra.mxu0 0.0
    %380 = vmatpush.msra.mxu0 0.0
    %381 = vmatpush.msra.mxu0 0.0
    %382 = vmatpush.msra.mxu0 0.0
    %383 = vmatpush.msra.mxu0 0.0
    %384 = vmatpush.msra.mxu0 0.0
    %385 = vmatpush.msra.mxu0 0.0
    %386 = vmatpush.msra.mxu0 0.0
    %387 = vmatpush.msra.mxu0 0.0
    %388 = vmatpush.msra.mxu0 0.0
    %389 = vmatpush.msra.mxu0 0.0
    %390 = vmatpush.msra.mxu0 %v366
    %391 = vmatpush.msra.mxu0 %v365
    %392 = vmatpush.msra.mxu0 %v364
    %393 = vmatpush.msra.mxu0 %v363
    %394 = vmatmul.f32.gmra.mxu0 %v373
    %v395 = vpop.f32.mrf.mxu0
    %v396 = vadd.f32 %v369, %v395
    %397 = vmatmul.f32.gmra.mxu0 %v376
    %v398 = vpop.f32.mrf.mxu0
    %v399 = vadd.f32 %v369, %v398
    %400 = vdwg.mxu0
    %v401 = vmax.f32 %v396, 0.0
    %v402 = vmax.f32 %v399, 0.0
    %v403 = vld [vmem:[%s5] sm:$0xff]
    %v404 = vld [vmem:[%s5 + $0x8] sm:$0xff]
    %v405 = vld [vmem:[%s5 + $0x10] sm:$0xff]
    %v406 = vld [vmem:[%s5 + $0x18] sm:$0xff]
    %v407 = vld [vmem:[%s6] sm:$0x1]
    %v409 = vperm.slane %v407, 0
    %v412 = vsel %vm371, %v401, 0
    %v415 = vsel %vm371, %v402, 0
    %417 = vmatpush.msra.mxu0 0.0
    %418 = vmatpush.msra.mxu0 0.0
    %419 = vmatpush.msra.mxu0 0.0
    %420 = vmatpush.msra.mxu0 0.0
    %421 = vmatpush.msra.mxu0 0.0
    %422 = vmatpush.msra.mxu0 0.0
    %423 = vmatpush.msra.mxu0 0.0
    %424 = vmatpush.msra.mxu0 0.0
    %425 = vmatpush.msra.mxu0 0.0
    %426 = vmatpush.msra.mxu0 0.0
    %427 = vmatpush.msra.mxu0 0.0
    %428 = vmatpush.msra.mxu0 0.0
    %429 = vmatpush.msra.mxu0 %v406
    %430 = vmatpush.msra.mxu0 %v405
    %431 = vmatpush.msra.mxu0 %v404
    %432 = vmatpush.msra.mxu0 %v403
    %433 = vmatmul.f32.gmra.mxu0 %v412
    %v434 = vpop.f32.mrf.mxu0
    %v435 = vadd.f32 %v409, %v434
    %436 = vmatmul.f32.gmra.mxu0 %v415
    %v437 = vpop.f32.mrf.mxu0
    %v438 = vadd.f32 %v409, %v437
    %439 = vdwg.mxu0
    %v440 = vmul.f32 %v435, %v435
    %v441 = vmul.f32 %v438, %v438
    %vm442 = vcmask 130048
    %v443 = vsel %vm442, %v440, 0.0
    %444 = vadd.xlane.f32.xlu0 %v443
    %v445 = vpop.xlane.xlu0 %444
    %v446 = vsel %vm442, %v441, 0.0
    %447 = vadd.xlane.f32.xlu0 %v446
    %v448 = vpop.xlane.xlu0 %447
    %v449 = vmax.f32 %v445, 1e-24
    %v450 = vmax.f32 %v448, 1e-24
    %v451 = vrsqrt.pop %v449
    %v452 = vmul.f32 %v451, %v449
    %v453 = vmul.f32 %v452, %v451
    %v454 = vmul.f32 0.5, %v453
    %v455 = vsub.f32 1.5, %v454
    %v456 = vmul.f32 %v451, %v455
    %vm457 = vweird.f32 %v449
    %vm458 = vweird.f32 %v451
    %vm459 = vmor %vm457, %vm458
    %v460 = vsel %vm459, %v451, %v456
    %v461 = vrsqrt.pop %v450
    %v462 = vmul.f32 %v461, %v450
    %v463 = vmul.f32 %v462, %v461
    %v464 = vmul.f32 0.5, %v463
    %v465 = vsub.f32 1.5, %v464
    %v466 = vmul.f32 %v461, %v465
    %vm467 = vweird.f32 %v450
    %vm468 = vweird.f32 %v461
    %vm469 = vmor %vm467, %vm468
    %v470 = vsel %vm469, %v461, %v466
    %v471 = vmul.f32 %v435, %v460
    %v472 = vmul.f32 %v438, %v470
    %473 = vst.msk [vmem:[#allocation2] sm:$0xff] %vm442, %v471
    %474 = vst.msk [vmem:[#allocation2 + $0x8] sm:$0xff] %vm442, %v472
    %v475 = vmul.f32 %v358, %v358
    %v476 = vmul.f32 %v361, %v361
    %v477 = vsel %vm371, %v475, 0.0
    %478 = vadd.xlane.f32.xlu0 %v477
    %v479 = vpop.xlane.xlu0 %478
    %v480 = vsel %vm371, %v476, 0.0
    %481 = vadd.xlane.f32.xlu0 %v480
    %v482 = vpop.xlane.xlu0 %481
    %v483 = vmax.f32 %v479, 1e-24
    %v484 = vmax.f32 %v482, 1e-24
    %v485 = vrsqrt.pop %v483
    %v486 = vmul.f32 %v485, %v483
    %v487 = vmul.f32 %v486, %v485
    %v488 = vmul.f32 0.5, %v487
    %v489 = vsub.f32 1.5, %v488
    %v490 = vmul.f32 %v485, %v489
    %vm491 = vweird.f32 %v483
    %vm492 = vweird.f32 %v485
    %vm493 = vmor %vm491, %vm492
    %v494 = vsel %vm493, %v485, %v490
    %v495 = vrsqrt.pop %v484
    %v496 = vmul.f32 %v495, %v484
    %v497 = vmul.f32 %v496, %v495
    %v498 = vmul.f32 0.5, %v497
    %v499 = vsub.f32 1.5, %v498
    %v500 = vmul.f32 %v495, %v499
    %vm501 = vweird.f32 %v484
    %vm502 = vweird.f32 %v495
    %vm503 = vmor %vm501, %vm502
    %v504 = vsel %vm503, %v495, %v500
    %v505 = vmul.f32 %v358, %v494
    %v506 = vmul.f32 %v361, %v504
    %507 = vst.msk [vmem:[#allocation4] sm:$0xff] %vm371, %v505
    %508 = vst.msk [vmem:[#allocation4 + $0x8] sm:$0xff] %vm371, %v506
    %v509 = vsel %vm371, %v358, -inf
    %510 = vmax.xlane.f32.xlu0 %v509
    %v511 = vpop.xlane.xlu0 %510
    %v512 = vsel %vm371, %v361, -inf
    %513 = vmax.xlane.f32.xlu0 %v512
    %v514 = vpop.xlane.xlu0 %513
    %v515 = vlaneseq
    %v516 = vand.u32 %v515, 127
    %vm517 = vcmp.eq.f32.partialorder %v358, %v511
    %vm518 = vcmp.eq.f32.partialorder %v361, %v514
    %v519 = vsel %vm517, %v516, 32
    %v520 = vsel %vm518, %v516, 32
    %v521 = vsel %vm371, %v519, 2147483647
    %v522 = vand.u32 %v521, 65535
    %v523 = vshra.s32 %v521, 16
    %v524 = vcvt.s32.f32 %v522
    %v525 = vcvt.s32.f32 %v523
    %526 = vmin.xlane.f32.xlu0 %v525
    %v527 = vpop.xlane.xlu0 %526
    %vm528 = vcmp.eq.f32.partialorder %v525, %v527
    %v529 = vsel %vm528, %v524, inf
    %530 = vmin.xlane.f32.xlu0 %v529
    %v531 = vpop.xlane.xlu0 %530
    %v532 = vcvt.f32.s32 %v531
    %v533 = vcvt.f32.s32 %v527
    %v534 = vshll.u32 %v533, 16
    %v535 = vadd.s32 %v534, %v532
    %v536 = vsel %vm371, %v520, 2147483647
    %v537 = vand.u32 %v536, 65535
    %v538 = vshra.s32 %v536, 16
    %v539 = vcvt.s32.f32 %v537
    %v540 = vcvt.s32.f32 %v538
    %541 = vmin.xlane.f32.xlu0 %v540
    %v542 = vpop.xlane.xlu0 %541
    %vm543 = vcmp.eq.f32.partialorder %v540, %v542
    %v544 = vsel %vm543, %v539, inf
    %545 = vmin.xlane.f32.xlu0 %v544
    %v546 = vpop.xlane.xlu0 %545
    %v547 = vcvt.f32.s32 %v546
    %v548 = vcvt.f32.s32 %v542
    %v549 = vshll.u32 %v548, 16
    %v550 = vadd.s32 %v549, %v547
    %vm551 = vcmask 7168
    %552 = vst.msk [vmem:[%s9] sm:$0xff] %vm551, %v535
    %553 = vst.msk [vmem:[%s9 + $0x8] sm:$0xff] %vm551, %v550
    // Predicated region
    $region30: #{tpu_custom_call.1} parent=1 // pred_check
      _
    $region31: #{tpu_custom_call.1} parent=1 // pred_check_branch
      %555 = sbr.rel (0) target = $region33
    $region32: #{tpu_custom_call.1} parent=1 // pred_region
      %557 = vsyncadd [#allocation3], 0
      %s558 = sshll.u32 [#allocation2], 4
      %s559 = int_to_ptr.vmem [resolvable:$true] %s558
      %s560 = sshll.u32 %s7, 4
      %s561 = int_to_ptr.hbm [resolvable:$true] %s560
      %566 = dma.vmem_to_hbm [thread:$0]  %s559, 256, %s561, [#allocation3], 128, 128, 8
    $region33: #{tpu_custom_call.1} parent=1 // pred_fallthru
      _
    // Predicated region
    $region34: #{tpu_custom_call.1} parent=1 // pred_check
      _
    $region35: #{tpu_custom_call.1} parent=1 // pred_check_branch
      %568 = sbr.rel (0) target = $region37
    $region36: #{tpu_custom_call.1} parent=1 // pred_region
      %570 = vsyncadd [#allocation5], 0
      %s571 = sshll.u32 [#allocation4], 4
      %s572 = int_to_ptr.vmem [resolvable:$true] %s571
      %s573 = sshll.u32 %s8, 4
      %s574 = int_to_ptr.hbm [resolvable:$true] %s573
      %579 = dma.vmem_to_hbm [thread:$0]  %s572, 256, %s574, [#allocation5], 128, 128, 8
    $region37: #{tpu_custom_call.1} parent=1 // pred_fallthru
      _
    // Predicated region
    $region38: #{tpu_custom_call.1} parent=1 // pred_check
      _
    $region39: #{tpu_custom_call.1} parent=1 // pred_check_branch
      %581 = sbr.rel (0) target = $region41
    $region40: #{tpu_custom_call.1} parent=1 // pred_region
      _
    $region41: #{tpu_custom_call.1} parent=1 // pred_fallthru
      _
    // Predicated region
    $region42: #{tpu_custom_call.1} parent=1 // pred_check
      _
    $region43: #{tpu_custom_call.1} parent=1 // pred_check_branch
      %583 = sbr.rel (0) target = $region45
    $region44: #{tpu_custom_call.1} parent=1 // pred_region
      %585 = dma.done [#allocation3], 256
    $region45: #{tpu_custom_call.1} parent=1 // pred_fallthru
      _
    // Predicated region
    $region46: #{tpu_custom_call.1} parent=1 // pred_check
      _
    $region47: #{tpu_custom_call.1} parent=1 // pred_check_branch
      %587 = sbr.rel (0) target = $region49
    $region48: #{tpu_custom_call.1} parent=1 // pred_region
      %589 = dma.done [#allocation5], 256
    $region49: #{tpu_custom_call.1} parent=1 // pred_fallthru
      _
    // Predicated region
    $region50: #{tpu_custom_call.1} parent=1 // pred_check
      _
    $region51: #{tpu_custom_call.1} parent=1 // pred_check_branch
      %591 = sbr.rel (0) target = $region53
    $region52: #{tpu_custom_call.1} parent=1 // pred_region
      _
    $region53: #{tpu_custom_call.1} parent=1 // pred_fallthru
      _
    %592 = vsyncpa [#allocation3], 1
    %593 = vsyncpa [#allocation5], 1

</llo_original>
